<compile_context>
chip_gen: v7x
topology: tpu7x:2x2x1
jax: 0.10.0
libtpu: 0.0.40
codegen_flags: <defaults>
</compile_context>

<pallas_src>
import jax
import jax.numpy as jnp
from jax.experimental import pallas as pl
from jax.experimental.pallas import tpu as pltpu


def _softplus(x):
    # numerically stable softplus (f32, VPU + EUP)
    return jnp.maximum(x, 0.0) + jnp.log1p(jnp.exp(-jnp.abs(x)))


def nb_decoder_kernel(z_ref, w1_ref, b1_ref, w2m_ref, b2m_ref, w2t_ref, b2t_ref,
                      r_ref, p_ref, h_ref):
    # Hidden layer: computed once per batch tile (feature axis is the inner
    # grid dim), cached in VMEM scratch, reused for every feature tile.
    @pl.when(pl.program_id(1) == 0)
    def _():
        h = jnp.dot(z_ref[...], w1_ref[...], preferred_element_type=jnp.float32)
        h = jnp.maximum(h + b1_ref[...], 0.0)
        h_ref[...] = h.astype(h_ref.dtype)

    h = h_ref[...]

    # Second layer, split into mu / theta column slabs -> one lane-dense
    # (TB, TF) output tile per grid step, no (B, 2F) intermediate.
    mu_raw = jnp.dot(h, w2m_ref[...], preferred_element_type=jnp.float32) + b2m_ref[...]
    th_raw = jnp.dot(h, w2t_ref[...], preferred_element_type=jnp.float32) + b2t_ref[...]

    mu = _softplus(mu_raw)
    theta = _softplus(th_raw)

    # p = theta / (theta + mu); approx reciprocal rides the EUP slot, eps guards 0/0.
    inv = pl.reciprocal(theta + mu + 1e-8, approx=True)
    r_ref[...] = theta.astype(r_ref.dtype)          # total_count
    p_ref[...] = (theta * inv).astype(p_ref.dtype)  # probs


def _pick_tile(total, cap, align):
    """Largest multiple of `align` that divides `total` and is <= cap (else `total`)."""
    if total <= cap:
        return total
    t = (cap // align) * align
    while t >= align and total % t != 0:
        t -= align
    return t if t >= align else total


def nb_decoder(z, w1, b1, w2, b2, *, tb_cap=256, tf_cap=512,
               compute_dtype=jnp.bfloat16, out_dtype=jnp.float32):
    """Fused NB-decoder forward. Returns (r, p) of shape (B, F)."""
    B, d_z = z.shape
    H = w1.shape[1]
    two_f = w2.shape[1]
    F = two_f // 2

    # Pre-split the second layer into mu / theta column slabs (torch.chunk dim=-1).
    b1 = b1.reshape(1, H).astype(jnp.float32)
    b2 = b2.reshape(1, two_f).astype(jnp.float32)
    w2_mu, w2_th = w2[:, :F], w2[:, F:]
    b2_mu, b2_th = b2[:, :F], b2[:, F:]

    # bf16 weight/activation stream; MXU accumulates f32, epilogue stays f32.
    z_c = z.astype(compute_dtype)
    w1_c = w1.astype(compute_dtype)
    w2m_c = w2_mu.astype(compute_dtype)
    w2t_c = w2_th.astype(compute_dtype)

    tb = _pick_tile(B, tb_cap, 8)      # batch tile (rows fed to the MXU)
    tf = _pick_tile(F, tf_cap, 128)    # feature tile (lane-dense output width)
    grid = (B // tb, F // tf)

    grid_spec = pltpu.PrefetchScalarGridSpec(
        num_scalar_prefetch=0,
        grid=grid,
        in_specs=[
            pl.BlockSpec((tb, d_z), lambda i, j: (i, 0)),   # z: per batch tile
            pl.BlockSpec((d_z, H), lambda i, j: (0, 0)),    # W1: VMEM-resident
            pl.BlockSpec((1, H), lambda i, j: (0, 0)),      # b1: VMEM-resident
            pl.BlockSpec((H, tf), lambda i, j: (0, j)),     # W2 mu-columns (streamed)
            pl.BlockSpec((1, tf), lambda i, j: (0, j)),     # b2 mu
            pl.BlockSpec((H, tf), lambda i, j: (0, j)),     # W2 theta-columns (streamed)
            pl.BlockSpec((1, tf), lambda i, j: (0, j)),     # b2 theta
        ],
        out_specs=(
            pl.BlockSpec((tb, tf), lambda i, j: (i, j)),    # r
            pl.BlockSpec((tb, tf), lambda i, j: (i, j)),    # p
        ),
        scratch_shapes=[pltpu.VMEM((tb, H), compute_dtype)],  # cached hidden acts
    )

    return pl.pallas_call(
        nb_decoder_kernel,
        out_shape=(
            jax.ShapeDtypeStruct((B, F), out_dtype),  # r (total_count)
            jax.ShapeDtypeStruct((B, F), out_dtype),  # p (probs)
        ),
        grid_spec=grid_spec,
        compiler_params=pltpu.CompilerParams(
            dimension_semantics=("parallel", "arbitrary"),
            vmem_limit_bytes=32 * 1024 * 1024,  # sized for v7x scoped VMEM; fine on v5e/v6e
        ),
    )(z_c, w1_c, b1, w2m_c, b2_mu, w2t_c, b2_th)


if __name__ == "__main__":
    # Small shapes consistent with the module: latent d_z -> 2*features.
    # Sized so the demo exercises a real (2 x 2) grid with the tile caps below.
    B, D_Z, HIDDEN, FEATURES = 16, 32, 64, 256

    key = jax.random.PRNGKey(0)
    k_z, k_w1, k_b1, k_w2, k_b2 = jax.random.split(key, 5)

    z = jax.random.normal(k_z, (B, D_Z), dtype=jnp.float32)
    # deterministic synthetic decoder_net parameters (Linear -> ReLU -> Linear)
    w1 = jax.random.normal(k_w1, (D_Z, HIDDEN), dtype=jnp.float32) * 0.1
    b1 = jax.random.normal(k_b1, (1, HIDDEN), dtype=jnp.float32) * 0.1
    w2 = jax.random.normal(k_w2, (HIDDEN, 2 * FEATURES), dtype=jnp.float32) * 0.1
    b2 = jax.random.normal(k_b2, (1, 2 * FEATURES), dtype=jnp.float32) * 0.1

    # Force a multi-tile grid (2 batch tiles x 2 feature tiles) at these small shapes.
    r, p = nb_decoder(z, w1, b1, w2, b2, tb_cap=8, tf_cap=128)
    jax.block_until_ready((r, p))

    # Reference in plain JAX, mirroring the kernel's mixed-precision path
    # (bf16 matmul operands, f32 accumulation and epilogue).
    cd = jnp.bfloat16
    h_ref = jnp.maximum(
        jnp.dot(z.astype(cd), w1.astype(cd), preferred_element_type=jnp.float32) + b1, 0.0)
    hc = h_ref.astype(cd)
    mu_raw = jnp.dot(hc, w2[:, :FEATURES].astype(cd),
                     preferred_element_type=jnp.float32) + b2[:, :FEATURES]
    th_raw = jnp.dot(hc, w2[:, FEATURES:].astype(cd),
                     preferred_element_type=jnp.float32) + b2[:, FEATURES:]
    mu_ref = jax.nn.softplus(mu_raw)
    th_ref = jax.nn.softplus(th_raw)
    p_ref = th_ref / (th_ref + mu_ref)

    assert r.shape == (B, FEATURES) and p.shape == (B, FEATURES)
    assert bool(jnp.all(jnp.isfinite(r))) and bool(jnp.all(jnp.isfinite(p)))
    # r matches the reference to f32/EUP precision; p additionally carries the
    # ~1e-3 relative error of the approximate reciprocal.
    assert jnp.allclose(r, th_ref, atol=1e-4, rtol=2e-3)
    assert jnp.allclose(p, p_ref, atol=1e-3, rtol=5e-3)

    # TODO(synk): td.Independent(td.NegativeBinomial(...), 1) is a distribution
    # object (sampling / log_prob machinery); the kernel returns its parameters
    # (r = total_count, p = probs) which fully determine it.
    print("KERNEL_OK")
</pallas_src>

<mosaic_0001>
module attributes {stable_mosaic.version = 11 : i64} {
  func.func @nb_decoder_kernel(%arg0: i32, %arg1: i32, %arg2: memref<8x32xbf16, #tpu.memory_space<vmem>>, %arg3: memref<32x64xbf16, #tpu.memory_space<vmem>>, %arg4: memref<1x64xf32, #tpu.memory_space<vmem>>, %arg5: memref<64x128xbf16, #tpu.memory_space<vmem>>, %arg6: memref<1x128xf32, #tpu.memory_space<vmem>>, %arg7: memref<64x128xbf16, #tpu.memory_space<vmem>>, %arg8: memref<1x128xf32, #tpu.memory_space<vmem>>, %arg9: memref<8x128xf32, #tpu.memory_space<vmem>>, %arg10: memref<8x128xf32, #tpu.memory_space<vmem>>, %arg11: memref<8x64xbf16, #tpu.memory_space<vmem>>) attributes {dimension_semantics = [#tpu.dimension_semantics<parallel>, #tpu.dimension_semantics<arbitrary>], iteration_bounds = array<i64: 2, 2>, scalar_prefetch = 0 : i64, scratch_operands = 1 : i64, tpu.core_type = #tpu.core_type<tc>, window_params = [{transform_indices = @transform_0, window_bounds = array<i64: 8, 32>}, {pipeline_mode = #tpu.pipeline_mode<synchronous>, transform_indices = @transform_1, window_bounds = array<i64: 32, 64>}, {pipeline_mode = #tpu.pipeline_mode<synchronous>, transform_indices = @transform_2, window_bounds = array<i64: 1, 64>}, {transform_indices = @transform_3, window_bounds = array<i64: 64, 128>}, {transform_indices = @transform_4, window_bounds = array<i64: 1, 128>}, {transform_indices = @transform_5, window_bounds = array<i64: 64, 128>}, {transform_indices = @transform_6, window_bounds = array<i64: 1, 128>}, {transform_indices = @transform_7, window_bounds = array<i64: 8, 128>}, {transform_indices = @transform_8, window_bounds = array<i64: 8, 128>}]} {
    %c0_i32 = arith.constant 0 : i32
    %0 = arith.cmpi eq, %arg1, %c0_i32 : i32
    %1 = arith.extui %0 : i1 to i32
    %c0_i32_0 = arith.constant 0 : i32
    %2 = arith.cmpi ne, %1, %c0_i32_0 : i32
    scf.if %2 {
      %c0_20 = arith.constant 0 : index
      %c0_21 = arith.constant 0 : index
      %37 = vector.load %arg2[%c0_20, %c0_21] : memref<8x32xbf16, #tpu.memory_space<vmem>>, vector<8x32xbf16>
      %c0_22 = arith.constant 0 : index
      %c0_23 = arith.constant 0 : index
      %38 = vector.load %arg3[%c0_22, %c0_23] : memref<32x64xbf16, #tpu.memory_space<vmem>>, vector<32x64xbf16>
      %cst_24 = arith.constant dense<0.000000e+00> : vector<8x64xf32>
      %39 = tpu.matmul %37, %38, %cst_24 {dimension_numbers = #tpu.dot_dimension_numbers<[1], [0], [0], [1], [0, 0, 1, 1], [], []>} : vector<8x32xbf16>, vector<32x64xbf16>, vector<8x64xf32> -> vector<8x64xf32>
      %c0_25 = arith.constant 0 : index
      %c0_26 = arith.constant 0 : index
      %40 = vector.load %arg4[%c0_25, %c0_26] : memref<1x64xf32, #tpu.memory_space<vmem>>, vector<1x64xf32>
      %41 = vector.broadcast %40 : vector<1x64xf32> to vector<8x64xf32>
      %42 = arith.addf %39, %41 : vector<8x64xf32>
      %cst_27 = arith.constant 0.000000e+00 : f32
      %43 = vector.broadcast %cst_27 : f32 to vector<8x64xf32>
      %44 = arith.maximumf %42, %43 : vector<8x64xf32>
      %45 = arith.truncf %44 : vector<8x64xf32> to vector<8x64xbf16>
      %c0_28 = arith.constant 0 : index
      %c0_29 = arith.constant 0 : index
      %46 = vector.load %arg11[%c0_28, %c0_29] : memref<8x64xbf16, #tpu.memory_space<vmem>>, vector<8x64xbf16>
      tpu.vector_store %arg11[%c0_28, %c0_29], %45 {strides = array<i32>} : memref<8x64xbf16, #tpu.memory_space<vmem>>, vector<8x64xbf16>,
    } else {
    }
    %c0 = arith.constant 0 : index
    %c0_1 = arith.constant 0 : index
    %3 = vector.load %arg11[%c0, %c0_1] : memref<8x64xbf16, #tpu.memory_space<vmem>>, vector<8x64xbf16>
    %c0_2 = arith.constant 0 : index
    %c0_3 = arith.constant 0 : index
    %4 = vector.load %arg5[%c0_2, %c0_3] : memref<64x128xbf16, #tpu.memory_space<vmem>>, vector<64x128xbf16>
    %cst = arith.constant dense<0.000000e+00> : vector<8x128xf32>
    %5 = tpu.matmul %3, %4, %cst {dimension_numbers = #tpu.dot_dimension_numbers<[1], [0], [0], [1], [0, 0, 1, 1], [], []>} : vector<8x64xbf16>, vector<64x128xbf16>, vector<8x128xf32> -> vector<8x128xf32>
    %c0_4 = arith.constant 0 : index
    %c0_5 = arith.constant 0 : index
    %6 = vector.load %arg6[%c0_4, %c0_5] : memref<1x128xf32, #tpu.memory_space<vmem>>, vector<1x128xf32>
    %7 = vector.broadcast %6 : vector<1x128xf32> to vector<8x128xf32>
    %8 = arith.addf %5, %7 : vector<8x128xf32>
    %c0_6 = arith.constant 0 : index
    %c0_7 = arith.constant 0 : index
    %9 = vector.load %arg7[%c0_6, %c0_7] : memref<64x128xbf16, #tpu.memory_space<vmem>>, vector<64x128xbf16>
    %cst_8 = arith.constant dense<0.000000e+00> : vector<8x128xf32>
    %10 = tpu.matmul %3, %9, %cst_8 {dimension_numbers = #tpu.dot_dimension_numbers<[1], [0], [0], [1], [0, 0, 1, 1], [], []>} : vector<8x64xbf16>, vector<64x128xbf16>, vector<8x128xf32> -> vector<8x128xf32>
    %c0_9 = arith.constant 0 : index
    %c0_10 = arith.constant 0 : index
    %11 = vector.load %arg8[%c0_9, %c0_10] : memref<1x128xf32, #tpu.memory_space<vmem>>, vector<1x128xf32>
    %12 = vector.broadcast %11 : vector<1x128xf32> to vector<8x128xf32>
    %13 = arith.addf %10, %12 : vector<8x128xf32>
    %cst_11 = arith.constant 0.000000e+00 : f32
    %14 = vector.broadcast %cst_11 : f32 to vector<8x128xf32>
    %15 = arith.maximumf %8, %14 : vector<8x128xf32>
    %16 = math.absf %8 : vector<8x128xf32>
    %cst_12 = arith.constant 0.000000e+00 : f32
    %17 = vector.broadcast %cst_12 : f32 to vector<8x128xf32>
    %18 = arith.subf %17, %16 : vector<8x128xf32>
    %19 = math.exp %18 : vector<8x128xf32>
    %20 = math.log1p %19 : vector<8x128xf32>
    %21 = arith.addf %15, %20 : vector<8x128xf32>
    %cst_13 = arith.constant 0.000000e+00 : f32
    %22 = vector.broadcast %cst_13 : f32 to vector<8x128xf32>
    %23 = arith.maximumf %13, %22 : vector<8x128xf32>
    %24 = math.absf %13 : vector<8x128xf32>
    %cst_14 = arith.constant 0.000000e+00 : f32
    %25 = vector.broadcast %cst_14 : f32 to vector<8x128xf32>
    %26 = arith.subf %25, %24 : vector<8x128xf32>
    %27 = math.exp %26 : vector<8x128xf32>
    %28 = math.log1p %27 : vector<8x128xf32>
    %29 = arith.addf %23, %28 : vector<8x128xf32>
    %30 = arith.addf %29, %21 : vector<8x128xf32>
    %cst_15 = arith.constant 9.99999993E-9 : f32
    %31 = vector.broadcast %cst_15 : f32 to vector<8x128xf32>
    %32 = arith.addf %30, %31 : vector<8x128xf32>
    %33 = tpu.reciprocal %32 {approx = true} : vector<8x128xf32> -> vector<8x128xf32>
    %c0_16 = arith.constant 0 : index
    %c0_17 = arith.constant 0 : index
    %34 = vector.load %arg9[%c0_16, %c0_17] : memref<8x128xf32, #tpu.memory_space<vmem>>, vector<8x128xf32>
    tpu.vector_store %arg9[%c0_16, %c0_17], %29 {strides = array<i32>} : memref<8x128xf32, #tpu.memory_space<vmem>>, vector<8x128xf32>,
    %35 = arith.mulf %29, %33 : vector<8x128xf32>
    %c0_18 = arith.constant 0 : index
    %c0_19 = arith.constant 0 : index
    %36 = vector.load %arg10[%c0_18, %c0_19] : memref<8x128xf32, #tpu.memory_space<vmem>>, vector<8x128xf32>
    tpu.vector_store %arg10[%c0_18, %c0_19], %35 {strides = array<i32>} : memref<8x128xf32, #tpu.memory_space<vmem>>, vector<8x128xf32>,
    return
  }
  func.func @transform_0(%arg0: i32, %arg1: i32) -> (i32, i32) {
    %c0_i32 = arith.constant 0 : i32
    %c0_i32_0 = arith.constant 0 : i32
    return %arg0, %c0_i32 : i32, i32
  }
  func.func @transform_1(%arg0: i32, %arg1: i32) -> (i32, i32) {
    %c0_i32 = arith.constant 0 : i32
    %c0_i32_0 = arith.constant 0 : i32
    %c0_i32_1 = arith.constant 0 : i32
    return %c0_i32, %c0_i32_0 : i32, i32
  }
  func.func @transform_2(%arg0: i32, %arg1: i32) -> (i32, i32) {
    %c0_i32 = arith.constant 0 : i32
    %c0_i32_0 = arith.constant 0 : i32
    %c0_i32_1 = arith.constant 0 : i32
    return %c0_i32, %c0_i32_0 : i32, i32
  }
  func.func @transform_3(%arg0: i32, %arg1: i32) -> (i32, i32) {
    %c0_i32 = arith.constant 0 : i32
    %c0_i32_0 = arith.constant 0 : i32
    return %c0_i32, %arg1 : i32, i32
  }
  func.func @transform_4(%arg0: i32, %arg1: i32) -> (i32, i32) {
    %c0_i32 = arith.constant 0 : i32
    %c0_i32_0 = arith.constant 0 : i32
    return %c0_i32, %arg1 : i32, i32
  }
  func.func @transform_5(%arg0: i32, %arg1: i32) -> (i32, i32) {
    %c0_i32 = arith.constant 0 : i32
    %c0_i32_0 = arith.constant 0 : i32
    return %c0_i32, %arg1 : i32, i32
  }
  func.func @transform_6(%arg0: i32, %arg1: i32) -> (i32, i32) {
    %c0_i32 = arith.constant 0 : i32
    %c0_i32_0 = arith.constant 0 : i32
    return %c0_i32, %arg1 : i32, i32
  }
  func.func @transform_7(%arg0: i32, %arg1: i32) -> (i32, i32) {
    %c0_i32 = arith.constant 0 : i32
    return %arg0, %arg1 : i32, i32
  }
  func.func @transform_8(%arg0: i32, %arg1: i32) -> (i32, i32) {
    %c0_i32 = arith.constant 0 : i32
    return %arg0, %arg1 : i32, i32
  }
}

</mosaic_0001>

<llo_original>
// kernel: tpu_custom_call.1
$region0: #{tpu_custom_call.1}
  #allocation0 [shape = 'u32[]', space=smem, size = 0x4, offset = 0x4, fixed_abs, tag = 'smem constant byte address 0x4 - core index']
  #allocation1 [shape = 'u32[144,128]{1,0:T(1,128)}', space=vmem, size = 0x12000, scoped, tag = 'internal scratch']
  #allocation2 [shape = 'bf16[8,64]{1,0:T(8,128)(2,1)}', space=vmem, size = 0x800, scoped, tag = 'scratch operand']
  %s0 = inlined_call_operand.hbm [shape: bf16[16,32], index: 0, kind: input, shape index: {}]
  %s1 = inlined_call_operand.hbm [shape: bf16[32,64], index: 1, kind: input, shape index: {}]
  %s2 = inlined_call_operand.vmem [shape: f32[1,64], index: 2, kind: input, shape index: {}]
  %s3 = inlined_call_operand.hbm [shape: bf16[64,256], index: 3, kind: input, shape index: {}]
  %s4 = inlined_call_operand.vmem [shape: f32[1,256], index: 4, kind: input, shape index: {}]
  %s5 = inlined_call_operand.hbm [shape: bf16[64,256], index: 5, kind: input, shape index: {}]
  %s6 = inlined_call_operand.vmem [shape: f32[1,256], index: 6, kind: input, shape index: {}]
  %s7 = inlined_call_operand.hbm [shape: f32[16,256], index: 7, kind: output, shape index: {0}]
  %s8 = inlined_call_operand.hbm [shape: f32[16,256], index: 8, kind: output, shape index: {1}]
  %9 = xla_tuple %s7, %s8
  %s10 = sld [smem:[#allocation0]]
  $region89: #{tpu_custom_call.1} parent=0
    _
  %s12 = ssub.s32 1, %s10
  %s13 = scalar_select 0, %s12, %s10
  $region1: #{tpu_custom_call.1} parent=0
    #allocation3 [shape = 'u8[4096]{0}', space=vmem, size = 0x1000, scoped, tag = 'input window, operand 0']
    #allocation4 [shape = 's32[2]{0}', space=sflag, size = 0x8, scoped, tag = 'scoped memory for tpu_custom_call.1']
    #allocation5 [shape = 's32[2]{0}', space=sflag, size = 0x8, scoped, tag = 'scoped memory for tpu_custom_call.1']
    #allocation6 [shape = 'u8[8192]{0}', space=vmem, size = 0x2000, scoped, tag = 'input window, operand 1, single buffered']
    #allocation7 [shape = 's32[1]{0}', space=sflag, size = 0x4, scoped, tag = 'scoped memory for tpu_custom_call.1']
    #allocation8 [shape = 'u8[32768]{0}', space=vmem, size = 0x8000, scoped, tag = 'input window, operand 3']
    #allocation9 [shape = 'u8[32768]{0}', space=vmem, size = 0x8000, scoped, tag = 'input window, operand 5']
    #allocation10 [shape = 'u8[8192]{0}', space=vmem, size = 0x2000, scoped, tag = 'output window, operand 0']
    #allocation11 [shape = 'u8[8192]{0}', space=vmem, size = 0x2000, scoped, tag = 'output window, operand 1']
    #allocation12 [shape = 's32[2]{0}', space=sflag, size = 0x8, scoped, tag = 'scoped memory for tpu_custom_call.1']
    %14 = vsyncpa [#allocation4], 0
    %s15 = scalar_lea.sflag [#allocation4], 1
    %16 = vsyncpa %s15, 0
    %17 = vsyncpa [#allocation7], 0
    %18 = vsyncpa [#allocation5], 0
    %s19 = scalar_lea.sflag [#allocation5], 1
    %20 = vsyncpa %s19, 0
    %21 = vsyncpa [#allocation12], 0
    %s22 = scalar_lea.sflag [#allocation12], 1
    %23 = vsyncpa %s22, 0
    loop: start=0, step=1, limit=6
    $region2: #{tpu_custom_call.1} parent=1 // loop_pre_header
      _
    $region3: #{tpu_custom_call.1} parent=1 // loop_header
      %s25 = sphi 0, %s29
      %p26 = scmp.ge.s32.totalorder %s25, 6
      %s32 = sphi 0, %s44
      %s33 = sphi 0, %s40
      %s34 = sphi 0, %s32
      %s35 = sphi 0, %s33
      %s36 = sphi 0, %s34
      %s37 = sphi 0, %s35
      %s47 = sphi 0, %s49
      %s50 = sphi 0, %s47
      %s51 = sphi 0, %s50
      %s67 = sphi 0, %s51
      %s71 = sphi 0, %s71
      %s73 = sphi 0, %s71
      %s74 = sphi 0, %s73
      %s88 = sphi 0, %s74
      %s92 = sphi 0, %s92
      %s94 = sphi 0, %s92
      %s95 = sphi 0, %s94
      %s109 = sphi 0, %s95
      %s115 = sphi 0, %s117
      %s118 = sphi 0, %s115
      %s119 = sphi 0, %s118
      %s135 = sphi 0, %s119
      %s141 = sphi 0, %s143
      %s144 = sphi 0, %s141
      %s145 = sphi 0, %s144
      %s161 = sphi 0, %s145
      %s167 = sphi 0, %s169
      %s170 = sphi 0, %s167
      %s171 = sphi 0, %s170
      %s187 = sphi 0, %s171
      %s193 = sphi 0, %s195
      %s196 = sphi 0, %s193
      %s197 = sphi 0, %s196
      %s213 = sphi 0, %s197
      %s221 = sphi 0, %s223
      %s224 = sphi 0, %s221
      %s225 = sphi 0, %s224
      %s241 = sphi 0, %s225
      %s249 = sphi 0, %s251
      %s252 = sphi 0, %s249
      %s253 = sphi 0, %s252
      %s269 = sphi 0, %s253
    $region4: #{tpu_custom_call.1} parent=1 // loop_header_branch
      %28 = sbr.rel (%p26) target = $region8
    $region5: #{tpu_custom_call.1} parent=1 // loop_body
      %s30 = ssub.s32 %s25, 1
      %s31 = ssub.s32 %s25, 2
      %s38 = sadd.s32 1, %s33
      %p39 = scmp.ge.s32.totalorder %s38, 2
      %s40 = scalar_select %p39, 0, %s38
      %s41 = sadd.s32 1, %s32
      %s42 = scalar_select %p39, %s41, %s32
      %p43 = scmp.ge.s32.totalorder %s42, 2
      %s44 = scalar_select %p43, 0, %s42
      %s45 = ssub.s32 %s32, %s44
      %p46 = scmp.eq.s32.totalorder %s45, 0
      %s48 = sadd.s32 %s47, 1
      %s49 = scalar_select %p46, %s47, %s48
      %p52 = pneg %p46
      %p53 = scmp.eq.s32.totalorder %s25, 3
      %p54 = por %p52, %p53
      %p55 = scmp.ne.s32.totalorder %s47, %s50
      %p56 = scmp.eq.s32.totalorder %s25, 0
      %p57 = por %p55, %p56
      %p58 = scmp.ne.s32.totalorder %s47, %s50
      %p59 = scmp.eq.s32.totalorder %s30, 3
      %p60 = por %p58, %p59
      %p61 = scmp.ne.s32.totalorder %s50, %s51
      %p62 = scmp.eq.s32.totalorder %s30, 0
      %p63 = por %p61, %p62
      %p64 = scmp.ne.s32.totalorder %s50, %s51
      %p65 = scmp.eq.s32.totalorder %s31, 3
      %p66 = por %p64, %p65
      %p68 = scmp.ne.s32.totalorder %s51, %s67
      %p69 = scmp.eq.s32.totalorder %s31, 0
      %p70 = por %p68, %p69
      %s72 = sadd.s32 %s71, 1
      %p75 = scmp.eq.s32.totalorder %s25, 3
      %p76 = scmp.ne.s32.totalorder %s71, %s73
      %p77 = scmp.eq.s32.totalorder %s25, 0
      %p78 = por %p76, %p77
      %p79 = scmp.ne.s32.totalorder %s71, %s73
      %p80 = scmp.eq.s32.totalorder %s30, 3
      %p81 = por %p79, %p80
      %p82 = scmp.ne.s32.totalorder %s73, %s74
      %p83 = scmp.eq.s32.totalorder %s30, 0
      %p84 = por %p82, %p83
      %p85 = scmp.ne.s32.totalorder %s73, %s74
      %p86 = scmp.eq.s32.totalorder %s31, 3
      %p87 = por %p85, %p86
      %p89 = scmp.ne.s32.totalorder %s74, %s88
      %p90 = scmp.eq.s32.totalorder %s31, 0
      %p91 = por %p89, %p90
      %s93 = sadd.s32 %s92, 1
      %p96 = scmp.eq.s32.totalorder %s25, 3
      %p97 = scmp.ne.s32.totalorder %s92, %s94
      %p98 = scmp.eq.s32.totalorder %s25, 0
      %p99 = por %p97, %p98
      %p100 = scmp.ne.s32.totalorder %s92, %s94
      %p101 = scmp.eq.s32.totalorder %s30, 3
      %p102 = por %p100, %p101
      %p103 = scmp.ne.s32.totalorder %s94, %s95
      %p104 = scmp.eq.s32.totalorder %s30, 0
      %p105 = por %p103, %p104
      %p106 = scmp.ne.s32.totalorder %s94, %s95
      %p107 = scmp.eq.s32.totalorder %s31, 3
      %p108 = por %p106, %p107
      %p110 = scmp.ne.s32.totalorder %s95, %s109
      %p111 = scmp.eq.s32.totalorder %s31, 0
      %p112 = por %p110, %p111
      %s113 = ssub.s32 %s33, %s40
      %p114 = scmp.eq.s32.totalorder %s113, 0
      %s116 = sadd.s32 %s115, 1
      %s117 = scalar_select %p114, %s115, %s116
      %p120 = pneg %p114
      %p121 = scmp.eq.s32.totalorder %s25, 3
      %p122 = por %p120, %p121
      %p123 = scmp.ne.s32.totalorder %s115, %s118
      %p124 = scmp.eq.s32.totalorder %s25, 0
      %p125 = por %p123, %p124
      %p126 = scmp.ne.s32.totalorder %s115, %s118
      %p127 = scmp.eq.s32.totalorder %s30, 3
      %p128 = por %p126, %p127
      %p129 = scmp.ne.s32.totalorder %s118, %s119
      %p130 = scmp.eq.s32.totalorder %s30, 0
      %p131 = por %p129, %p130
      %p132 = scmp.ne.s32.totalorder %s118, %s119
      %p133 = scmp.eq.s32.totalorder %s31, 3
      %p134 = por %p132, %p133
      %p136 = scmp.ne.s32.totalorder %s119, %s135
      %p137 = scmp.eq.s32.totalorder %s31, 0
      %p138 = por %p136, %p137
      %s139 = ssub.s32 %s33, %s40
      %p140 = scmp.eq.s32.totalorder %s139, 0
      %s142 = sadd.s32 %s141, 1
      %s143 = scalar_select %p140, %s141, %s142
      %p146 = pneg %p140
      %p147 = scmp.eq.s32.totalorder %s25, 3
      %p148 = por %p146, %p147
      %p149 = scmp.ne.s32.totalorder %s141, %s144
      %p150 = scmp.eq.s32.totalorder %s25, 0
      %p151 = por %p149, %p150
      %p152 = scmp.ne.s32.totalorder %s141, %s144
      %p153 = scmp.eq.s32.totalorder %s30, 3
      %p154 = por %p152, %p153
      %p155 = scmp.ne.s32.totalorder %s144, %s145
      %p156 = scmp.eq.s32.totalorder %s30, 0
      %p157 = por %p155, %p156
      %p158 = scmp.ne.s32.totalorder %s144, %s145
      %p159 = scmp.eq.s32.totalorder %s31, 3
      %p160 = por %p158, %p159
      %p162 = scmp.ne.s32.totalorder %s145, %s161
      %p163 = scmp.eq.s32.totalorder %s31, 0
      %p164 = por %p162, %p163
      %s165 = ssub.s32 %s33, %s40
      %p166 = scmp.eq.s32.totalorder %s165, 0
      %s168 = sadd.s32 %s167, 1
      %s169 = scalar_select %p166, %s167, %s168
      %p172 = pneg %p166
      %p173 = scmp.eq.s32.totalorder %s25, 3
      %p174 = por %p172, %p173
      %p175 = scmp.ne.s32.totalorder %s167, %s170
      %p176 = scmp.eq.s32.totalorder %s25, 0
      %p177 = por %p175, %p176
      %p178 = scmp.ne.s32.totalorder %s167, %s170
      %p179 = scmp.eq.s32.totalorder %s30, 3
      %p180 = por %p178, %p179
      %p181 = scmp.ne.s32.totalorder %s170, %s171
      %p182 = scmp.eq.s32.totalorder %s30, 0
      %p183 = por %p181, %p182
      %p184 = scmp.ne.s32.totalorder %s170, %s171
      %p185 = scmp.eq.s32.totalorder %s31, 3
      %p186 = por %p184, %p185
      %p188 = scmp.ne.s32.totalorder %s171, %s187
      %p189 = scmp.eq.s32.totalorder %s31, 0
      %p190 = por %p188, %p189
      %s191 = ssub.s32 %s33, %s40
      %p192 = scmp.eq.s32.totalorder %s191, 0
      %s194 = sadd.s32 %s193, 1
      %s195 = scalar_select %p192, %s193, %s194
      %p198 = pneg %p192
      %p199 = scmp.eq.s32.totalorder %s25, 3
      %p200 = por %p198, %p199
      %p201 = scmp.ne.s32.totalorder %s193, %s196
      %p202 = scmp.eq.s32.totalorder %s25, 0
      %p203 = por %p201, %p202
      %p204 = scmp.ne.s32.totalorder %s193, %s196
      %p205 = scmp.eq.s32.totalorder %s30, 3
      %p206 = por %p204, %p205
      %p207 = scmp.ne.s32.totalorder %s196, %s197
      %p208 = scmp.eq.s32.totalorder %s30, 0
      %p209 = por %p207, %p208
      %p210 = scmp.ne.s32.totalorder %s196, %s197
      %p211 = scmp.eq.s32.totalorder %s31, 3
      %p212 = por %p210, %p211
      %p214 = scmp.ne.s32.totalorder %s197, %s213
      %p215 = scmp.eq.s32.totalorder %s31, 0
      %p216 = por %p214, %p215
      %s217 = ssub.s32 %s32, %s44
      %s218 = ssub.s32 %s33, %s40
      %s219 = sor.u32 %s217, %s218
      %p220 = scmp.eq.s32.totalorder %s219, 0
      %s222 = sadd.s32 %s221, 1
      %s223 = scalar_select %p220, %s221, %s222
      %p226 = pneg %p220
      %p227 = scmp.eq.s32.totalorder %s25, 3
      %p228 = por %p226, %p227
      %p229 = scmp.ne.s32.totalorder %s221, %s224
      %p230 = scmp.eq.s32.totalorder %s25, 0
      %p231 = por %p229, %p230
      %p232 = scmp.ne.s32.totalorder %s221, %s224
      %p233 = scmp.eq.s32.totalorder %s30, 3
      %p234 = por %p232, %p233
      %p235 = scmp.ne.s32.totalorder %s224, %s225
      %p236 = scmp.eq.s32.totalorder %s30, 0
      %p237 = por %p235, %p236
      %p238 = scmp.ne.s32.totalorder %s224, %s225
      %p239 = scmp.eq.s32.totalorder %s31, 3
      %p240 = por %p238, %p239
      %p242 = scmp.ne.s32.totalorder %s225, %s241
      %p243 = scmp.eq.s32.totalorder %s31, 0
      %p244 = por %p242, %p243
      %s245 = ssub.s32 %s32, %s44
      %s246 = ssub.s32 %s33, %s40
      %s247 = sor.u32 %s245, %s246
      %p248 = scmp.eq.s32.totalorder %s247, 0
      %s250 = sadd.s32 %s249, 1
      %s251 = scalar_select %p248, %s249, %s250
      %p254 = pneg %p248
      %p255 = scmp.eq.s32.totalorder %s25, 3
      %p256 = por %p254, %p255
      %p257 = scmp.ne.s32.totalorder %s249, %s252
      %p258 = scmp.eq.s32.totalorder %s25, 0
      %p259 = por %p257, %p258
      %p260 = scmp.ne.s32.totalorder %s249, %s252
      %p261 = scmp.eq.s32.totalorder %s30, 3
      %p262 = por %p260, %p261
      %p263 = scmp.ne.s32.totalorder %s252, %s253
      %p264 = scmp.eq.s32.totalorder %s30, 0
      %p265 = por %p263, %p264
      %p266 = scmp.ne.s32.totalorder %s252, %s253
      %p267 = scmp.eq.s32.totalorder %s31, 3
      %p268 = por %p266, %p267
      %p270 = scmp.ne.s32.totalorder %s253, %s269
      %p271 = scmp.eq.s32.totalorder %s31, 0
      %p272 = por %p270, %p271
      %p273 = scmp.le.s32.totalorder 1, %s25
      %p274 = scmp.lt.s32.totalorder %s25, 5
      %p275 = pnand %p273, %p274
      %p276 = pneg %p275
      // Predicated region
      $region9: #{tpu_custom_call.1} parent=5 // pred_check
        _
      $region10: #{tpu_custom_call.1} parent=5 // pred_check_branch
        %278 = sbr.rel (%p275) target = $region12
      $region11: #{tpu_custom_call.1} parent=5 // pred_region
        %s279 = ssub.s32 %s25, 1
        // Predicated region
        $region13: #{tpu_custom_call.1} parent=11 // pred_check
          %p280 = pneg %p84
        $region14: #{tpu_custom_call.1} parent=11 // pred_check_branch
          %282 = sbr.rel (%p280) target = $region16
        $region15: #{tpu_custom_call.1} parent=11 // pred_region
          %s284 = ssub.s32 256, 256
          %285 = vsyncadd [#allocation7], %s284
          %s286 = sshll.u32 [#allocation6], 4
          %s287 = int_to_ptr.vmem [resolvable:$true] %s286
          %292 = dma.hbm_to_vmem [thread:$0]  %s1, 256, %s287, [#allocation7], 64, 64, 4
        $region16: #{tpu_custom_call.1} parent=11 // pred_fallthru
          _
        // Predicated region
        $region17: #{tpu_custom_call.1} parent=11 // pred_check
          %p293 = pneg %p105
        $region18: #{tpu_custom_call.1} parent=11 // pred_check_branch
          %295 = sbr.rel (%p293) target = $region20
        $region19: #{tpu_custom_call.1} parent=11 // pred_region
          _
        $region20: #{tpu_custom_call.1} parent=11 // pred_fallthru
          _
      $region12: #{tpu_custom_call.1} parent=5 // pred_fallthru
        _
      %p296 = scmp.lt.s32.totalorder %s25, 4
      // Predicated region
      $region21: #{tpu_custom_call.1} parent=5 // pred_check
        %p297 = pneg %p296
      $region22: #{tpu_custom_call.1} parent=5 // pred_check_branch
        %299 = sbr.rel (%p297) target = $region24
      $region23: #{tpu_custom_call.1} parent=5 // pred_region
        // Predicated region
        $region25: #{tpu_custom_call.1} parent=23 // pred_check
          %p300 = pneg %p57
        $region26: #{tpu_custom_call.1} parent=23 // pred_check_branch
          %302 = sbr.rel (%p300) target = $region28
        $region27: #{tpu_custom_call.1} parent=23 // pred_region
          %s303 = sand.u32 %s25, 1
          %s304 = scalar_lea.sflag [#allocation4], %s303
          %s305 = sand.u32 %s47, 1
          %s306 = smul.addr %s305, 4
          %s307 = scalar_lea.vmem [#allocation3], %s306
          %s309 = ssub.s32 64, 64
          %310 = vsyncadd %s304, %s309
          %s311 = smul.addr %s32, 64
          %s312 = scalar_lea.hbm %s0, %s311
          %s314 = sshll.u32 %s307, 4
          %s315 = int_to_ptr.vmem [resolvable:$true] %s314
          %317 = dma.hbm_to_vmem [thread:$0]  %s312, 64, %s315, %s304
        $region28: #{tpu_custom_call.1} parent=23 // pred_fallthru
          _
        // Predicated region
        $region29: #{tpu_custom_call.1} parent=23 // pred_check
          %p318 = pneg %p125
        $region30: #{tpu_custom_call.1} parent=23 // pred_check_branch
          %320 = sbr.rel (%p318) target = $region32
        $region31: #{tpu_custom_call.1} parent=23 // pred_region
          %s321 = sand.u32 %s25, 1
          %s322 = scalar_lea.sflag [#allocation4], %s321
          %s323 = sand.u32 %s115, 1
          %s324 = smul.addr %s323, 32
          %s325 = scalar_lea.vmem [#allocation8], %s324
          %s327 = ssub.s32 512, 512
          %328 = vsyncadd %s322, %s327
          %s329 = smul.addr %s33, 64
          %s330 = scalar_lea.hbm %s3, %s329
          %s331 = sshll.u32 %s325, 4
          %s332 = int_to_ptr.vmem [resolvable:$true] %s331
          %337 = dma.hbm_to_vmem [thread:$0]  %s330, 512, %s332, %s322, 128, 64, 4
        $region32: #{tpu_custom_call.1} parent=23 // pred_fallthru
          _
        // Predicated region
        $region33: #{tpu_custom_call.1} parent=23 // pred_check
          %p338 = pneg %p151
        $region34: #{tpu_custom_call.1} parent=23 // pred_check_branch
          %340 = sbr.rel (%p338) target = $region36
        $region35: #{tpu_custom_call.1} parent=23 // pred_region
          %p341 = scmp.lt.s32.totalorder %s33, 1
          %s342 = scalar_select %p341, %s33, 1
          %s343 = scalar_lea.vmem %s4, %s342
        $region36: #{tpu_custom_call.1} parent=23 // pred_fallthru
          _
        // Predicated region
        $region37: #{tpu_custom_call.1} parent=23 // pred_check
          %p344 = pneg %p177
        $region38: #{tpu_custom_call.1} parent=23 // pred_check_branch
          %346 = sbr.rel (%p344) target = $region40
        $region39: #{tpu_custom_call.1} parent=23 // pred_region
          %s347 = sand.u32 %s25, 1
          %s348 = scalar_lea.sflag [#allocation4], %s347
          %s349 = sand.u32 %s167, 1
          %s350 = smul.addr %s349, 32
          %s351 = scalar_lea.vmem [#allocation9], %s350
          %s353 = ssub.s32 512, 512
          %354 = vsyncadd %s348, %s353
          %s355 = smul.addr %s33, 64
          %s356 = scalar_lea.hbm %s5, %s355
          %s357 = sshll.u32 %s351, 4
          %s358 = int_to_ptr.vmem [resolvable:$true] %s357
          %363 = dma.hbm_to_vmem [thread:$0]  %s356, 512, %s358, %s348, 128, 64, 4
        $region40: #{tpu_custom_call.1} parent=23 // pred_fallthru
          _
        // Predicated region
        $region41: #{tpu_custom_call.1} parent=23 // pred_check
          %p364 = pneg %p203
        $region42: #{tpu_custom_call.1} parent=23 // pred_check_branch
          %366 = sbr.rel (%p364) target = $region44
        $region43: #{tpu_custom_call.1} parent=23 // pred_region
          %p367 = scmp.lt.s32.totalorder %s33, 1
          %s368 = scalar_select %p367, %s33, 1
          %s369 = scalar_lea.vmem %s6, %s368
        $region44: #{tpu_custom_call.1} parent=23 // pred_fallthru
          _
      $region24: #{tpu_custom_call.1} parent=5 // pred_fallthru
        _
      %p370 = scmp.le.s32.totalorder 1, %s25
      %p371 = scmp.lt.s32.totalorder %s25, 5
      %p372 = pnand %p370, %p371
      %p373 = pneg %p372
      // Predicated region
      $region45: #{tpu_custom_call.1} parent=5 // pred_check
        _
      $region46: #{tpu_custom_call.1} parent=5 // pred_check_branch
        %375 = sbr.rel (%p372) target = $region48
      $region47: #{tpu_custom_call.1} parent=5 // pred_region
        %s376 = ssub.s32 %s25, 1
        %s377 = sand.u32 %s30, 1
        %s378 = scalar_lea.sflag [#allocation4], %s377
        %s379 = sand.u32 %s50, 1
        %s380 = smul.addr %s379, 4
        %s381 = scalar_lea.vmem [#allocation3], %s380
        // Predicated region
        $region49: #{tpu_custom_call.1} parent=47 // pred_check
          %p382 = pneg %p63
        $region50: #{tpu_custom_call.1} parent=47 // pred_check_branch
          %384 = sbr.rel (%p382) target = $region52
        $region51: #{tpu_custom_call.1} parent=47 // pred_region
          %385 = dma.done %s378, 64
        $region52: #{tpu_custom_call.1} parent=47 // pred_fallthru
          _
        // Predicated region
        $region53: #{tpu_custom_call.1} parent=47 // pred_check
          %p386 = pneg %p84
        $region54: #{tpu_custom_call.1} parent=47 // pred_check_branch
          %388 = sbr.rel (%p386) target = $region56
        $region55: #{tpu_custom_call.1} parent=47 // pred_region
          %389 = dma.done [#allocation7], 256
        $region56: #{tpu_custom_call.1} parent=47 // pred_fallthru
          _
        %s390 = sand.u32 %s30, 1
        %s391 = scalar_lea.sflag [#allocation4], %s390
        %s392 = sand.u32 %s118, 1
        %s393 = smul.addr %s392, 32
        %s394 = scalar_lea.vmem [#allocation8], %s393
        // Predicated region
        $region57: #{tpu_custom_call.1} parent=47 // pred_check
          %p395 = pneg %p131
        $region58: #{tpu_custom_call.1} parent=47 // pred_check_branch
          %397 = sbr.rel (%p395) target = $region60
        $region59: #{tpu_custom_call.1} parent=47 // pred_region
          %398 = dma.done %s391, 512
        $region60: #{tpu_custom_call.1} parent=47 // pred_fallthru
          _
        %s399 = sand.u32 %s30, 1
        %s400 = scalar_lea.sflag [#allocation4], %s399
        %s401 = sand.u32 %s170, 1
        %s402 = smul.addr %s401, 32
        %s403 = scalar_lea.vmem [#allocation9], %s402
        // Predicated region
        $region61: #{tpu_custom_call.1} parent=47 // pred_check
          %p404 = pneg %p183
        $region62: #{tpu_custom_call.1} parent=47 // pred_check_branch
          %406 = sbr.rel (%p404) target = $region64
        $region63: #{tpu_custom_call.1} parent=47 // pred_region
          %407 = dma.done %s400, 512
        $region64: #{tpu_custom_call.1} parent=47 // pred_fallthru
          _
        %s408 = sand.u32 %s30, 1
        %s409 = scalar_lea.sflag [#allocation4], %s408
        %s410 = sand.u32 %s50, 1
        %s411 = smul.addr %s410, 4
        %s412 = scalar_lea.vmem [#allocation3], %s411
        %p413 = pneg %p63
        %p414 = pneg %p60
        %p415 = pneg %p84
        %p416 = pneg %p81
        %p417 = pneg %p105
        %p418 = pneg %p102
        %s419 = sand.u32 %s30, 1
        %s420 = scalar_lea.sflag [#allocation4], %s419
        %s421 = sand.u32 %s118, 1
        %s422 = smul.addr %s421, 32
        %s423 = scalar_lea.vmem [#allocation8], %s422
        %p424 = pneg %p131
        %p425 = pneg %p128
        %p426 = scmp.lt.s32.totalorder %s35, 1
        %s427 = scalar_select %p426, %s35, 1
        %s428 = scalar_lea.vmem %s4, %s427
        %p429 = pneg %p157
        %p430 = pneg %p154
        %s431 = sand.u32 %s30, 1
        %s432 = scalar_lea.sflag [#allocation4], %s431
        %s433 = sand.u32 %s170, 1
        %s434 = smul.addr %s433, 32
        %s435 = scalar_lea.vmem [#allocation9], %s434
        %p436 = pneg %p183
        %p437 = pneg %p180
        %p438 = scmp.lt.s32.totalorder %s35, 1
        %s439 = scalar_select %p438, %s35, 1
        %s440 = scalar_lea.vmem %s6, %s439
        %p441 = pneg %p209
        %p442 = pneg %p206
        %p443 = pneg %p237
        %p444 = pneg %p234
        %s445 = sand.u32 %s224, 1
        %s446 = scalar_lea.sflag [#allocation5], %s445
        %s447 = sand.u32 %s224, 1
        %s448 = smul.addr %s447, 8
        %s449 = scalar_lea.vmem [#allocation10], %s448
        %p450 = pneg %p265
        %p451 = pneg %p262
        %s452 = sand.u32 %s252, 1
        %s453 = scalar_lea.sflag [#allocation12], %s452
        %s454 = sand.u32 %s252, 1
        %s455 = smul.addr %s454, 8
        %s456 = scalar_lea.vmem [#allocation11], %s455
        %p457 = scmp.lt.s32.totalorder %s35, 1
        %s458 = scalar_select %p457, %s35, 1
        %s459 = scalar_lea.vmem %s4, %s458
        %p460 = scmp.lt.s32.totalorder %s35, 1
        %s461 = scalar_select %p460, %s35, 1
        %s462 = scalar_lea.vmem %s6, %s461
        %p464 = scmp.eq.s32.totalorder %s35, 0
        // Predicated region
        $region65: #{tpu_custom_call.1} parent=47 // pred_check
          %p465 = pneg %p464
        $region66: #{tpu_custom_call.1} parent=47 // pred_check_branch
          %467 = sbr.rel (%p465) target = $region68
        $region67: #{tpu_custom_call.1} parent=47 // pred_region
          %v468 = vld [vmem:[%s381] sm:$0xf]
          %v469 = vld [vmem:[#allocation6] sm:$0xf]
          %v470 = vld [vmem:[#allocation6 + $0x4] sm:$0xf]
          %v471 = vld [vmem:[#allocation6 + $0x8] sm:$0xf]
          %v472 = vld [vmem:[#allocation6 + $0xc] sm:$0xf]
          %v473 = vld [vmem:[%s2] sm:$0x1]
          %v475 = vlaneseq
          %v476 = vshrl.u32 %v475, 7
          %v477 = vsub.s32 0, %v476
          %v478 = vrot.slane %v473, %v477
          %v484 = vunpack.c.l.b16 %v469
          %v485 = vunpack.c.l.b16 %v470
          %v486 = vunpack.c.l.b16 %v471
          %v487 = vunpack.c.l.b16 %v472
          %v488 = vpack.c.b16 %v485, %v484
          %v489 = vpack.c.b16 %v487, %v486
          %vm492 = vcmask 261120
          %v494 = vsel %vm492, %v468, 0
          %496 = vmatprep.subr.bf16.mxu0 0
          %497 = vmatpush1.bf16.msra.mxu0 %v488
          %498 = vmatprep.subr.bf16.mxu0 0
          %499 = vmatpush1.bf16.msra.mxu0 %v489
          %500 = vmatprep.subr.bf16.mxu0 0
          %501 = vmatpush1.bf16.msra.mxu0 0
          %502 = vmatprep.subr.bf16.mxu0 0
          %503 = vmatpush1.bf16.msra.mxu0 0
          %504 = vmatprep.subr.bf16.mxu0 0
          %505 = vmatpush1.bf16.msra.mxu0 0
          %506 = vmatprep.subr.bf16.mxu0 0
          %507 = vmatpush1.bf16.msra.mxu0 0
          %508 = vmatprep.subr.bf16.mxu0 0
          %509 = vmatpush1.bf16.msra.mxu0 0
          %510 = vmatprep.subr.bf16.mxu0 0
          %511 = vmatpush1.bf16.msra.mxu0 0
          %512 = vmatprep.subr.bf16.mxu0 0
          %513 = vmatpush1.bf16.msra.mxu0 0
          %514 = vmatprep.subr.bf16.mxu0 0
          %515 = vmatpush1.bf16.msra.mxu0 0
          %516 = vmatprep.subr.bf16.mxu0 0
          %517 = vmatpush1.bf16.msra.mxu0 0
          %518 = vmatprep.subr.bf16.mxu0 0
          %519 = vmatpush1.bf16.msra.mxu0 0
          %520 = vmatprep.subr.bf16.mxu0 0
          %521 = vmatpush1.bf16.msra.mxu0 0
          %522 = vmatprep.subr.bf16.mxu0 0
          %523 = vmatpush1.bf16.msra.mxu0 0
          %524 = vmatprep.subr.bf16.mxu0 0
          %525 = vmatpush1.bf16.msra.mxu0 0
          %526 = vmatprep.subr.bf16.mxu0 0
          %527 = vmatpush1.bf16.msra.mxu0 0
          %528 = vmatprep.mubr.bf16.mxu0 0
          %529 = vmatmul.mubr.bf16.gmra.mrb[0].mxu0 %v494
          %v530 = vpop.f32.mrb[0].mxu0
          %v531 = vadd.f32 %v478, %v530
          %v532 = vpop.f32.mrb[0].mxu0
          %v533 = vpop.f32.mrb[0].mxu0
          %v534 = vpop.f32.mrb[0].mxu0
          %535 = vdwg.mxu0
          %v536 = vmax.f32 %v531, 0.0
          %v537 = vpack.c.bf16 %v536, %v536
          %vm538 = vcmask 519168
          %539 = vst.msk [vmem:[#allocation2] sm:$0xf] %vm538, %v537
        $region68: #{tpu_custom_call.1} parent=47 // pred_fallthru
          _
        %v540 = vld [vmem:[#allocation2] sm:$0xf]
        %v541 = vld [vmem:[%s394] sm:$0xf]
        %v542 = vld [vmem:[%s394 + $0x4] sm:$0xf]
        %v543 = vld [vmem:[%s394 + $0x8] sm:$0xf]
        %v544 = vld [vmem:[%s394 + $0xc] sm:$0xf]
        %v545 = vld [vmem:[%s394 + $0x10] sm:$0xf]
        %v546 = vld [vmem:[%s394 + $0x14] sm:$0xf]
        %v547 = vld [vmem:[%s394 + $0x18] sm:$0xf]
        %v548 = vld [vmem:[%s394 + $0x1c] sm:$0xf]
        %v549 = vld [vmem:[%s459] sm:$0x1]
        %v551 = vlaneseq
        %v552 = vshrl.u32 %v551, 7
        %v553 = vsub.s32 0, %v552
        %v554 = vrot.slane %v549, %v553
        %v564 = vunpack.c.l.b16 %v541
        %v565 = vunpack.c.l.b16 %v542
        %v566 = vunpack.c.l.b16 %v543
        %v567 = vunpack.c.l.b16 %v544
        %v568 = vunpack.c.l.b16 %v545
        %v569 = vunpack.c.l.b16 %v546
        %v570 = vunpack.c.l.b16 %v547
        %v571 = vunpack.c.l.b16 %v548
        %v572 = vpack.c.b16 %v565, %v564
        %v573 = vpack.c.b16 %v567, %v566
        %v574 = vpack.c.b16 %v569, %v568
        %v575 = vpack.c.b16 %v571, %v570
        %vm580 = vcmask 523264
        %v582 = vsel %vm580, %v540, 0
        %584 = vmatprep.subr.bf16.mxu0 0
        %585 = vmatpush1.bf16.msra.mxu0 %v572
        %586 = vmatprep.subr.bf16.mxu0 0
        %587 = vmatpush1.bf16.msra.mxu0 %v573
        %588 = vmatprep.subr.bf16.mxu0 0
        %589 = vmatpush1.bf16.msra.mxu0 %v574
        %590 = vmatprep.subr.bf16.mxu0 0
        %591 = vmatpush1.bf16.msra.mxu0 %v575
        %592 = vmatprep.subr.bf16.mxu0 0
        %593 = vmatpush1.bf16.msra.mxu0 0
        %594 = vmatprep.subr.bf16.mxu0 0
        %595 = vmatpush1.bf16.msra.mxu0 0
        %596 = vmatprep.subr.bf16.mxu0 0
        %597 = vmatpush1.bf16.msra.mxu0 0
        %598 = vmatprep.subr.bf16.mxu0 0
        %599 = vmatpush1.bf16.msra.mxu0 0
        %600 = vmatprep.subr.bf16.mxu0 0
        %601 = vmatpush1.bf16.msra.mxu0 0
        %602 = vmatprep.subr.bf16.mxu0 0
        %603 = vmatpush1.bf16.msra.mxu0 0
        %604 = vmatprep.subr.bf16.mxu0 0
        %605 = vmatpush1.bf16.msra.mxu0 0
        %606 = vmatprep.subr.bf16.mxu0 0
        %607 = vmatpush1.bf16.msra.mxu0 0
        %608 = vmatprep.subr.bf16.mxu0 0
        %609 = vmatpush1.bf16.msra.mxu0 0
        %610 = vmatprep.subr.bf16.mxu0 0
        %611 = vmatpush1.bf16.msra.mxu0 0
        %612 = vmatprep.subr.bf16.mxu0 0
        %613 = vmatpush1.bf16.msra.mxu0 0
        %614 = vmatprep.subr.bf16.mxu0 0
        %615 = vmatpush1.bf16.msra.mxu0 0
        %616 = vmatprep.mubr.bf16.mxu0 0
        %617 = vmatmul.mubr.bf16.gmra.mrb[0].mxu0 %v582
        %v618 = vpop.f32.mrb[0].mxu0
        %v619 = vadd.f32 %v554, %v618
        %v620 = vpop.f32.mrb[0].mxu0
        %v621 = vpop.f32.mrb[0].mxu0
        %v622 = vpop.f32.mrb[0].mxu0
        %623 = vdwg.mxu0
        %v624 = vld [vmem:[%s403] sm:$0xf]
        %v625 = vld [vmem:[%s403 + $0x4] sm:$0xf]
        %v626 = vld [vmem:[%s403 + $0x8] sm:$0xf]
        %v627 = vld [vmem:[%s403 + $0xc] sm:$0xf]
        %v628 = vld [vmem:[%s403 + $0x10] sm:$0xf]
        %v629 = vld [vmem:[%s403 + $0x14] sm:$0xf]
        %v630 = vld [vmem:[%s403 + $0x18] sm:$0xf]
        %v631 = vld [vmem:[%s403 + $0x1c] sm:$0xf]
        %v632 = vld [vmem:[%s462] sm:$0x1]
        %v634 = vlaneseq
        %v635 = vshrl.u32 %v634, 7
        %v636 = vsub.s32 0, %v635
        %v637 = vrot.slane %v632, %v636
        %v647 = vunpack.c.l.b16 %v624
        %v648 = vunpack.c.l.b16 %v625
        %v649 = vunpack.c.l.b16 %v626
        %v650 = vunpack.c.l.b16 %v627
        %v651 = vunpack.c.l.b16 %v628
        %v652 = vunpack.c.l.b16 %v629
        %v653 = vunpack.c.l.b16 %v630
        %v654 = vunpack.c.l.b16 %v631
        %v655 = vpack.c.b16 %v648, %v647
        %v656 = vpack.c.b16 %v650, %v649
        %v657 = vpack.c.b16 %v652, %v651
        %v658 = vpack.c.b16 %v654, %v653
        %663 = vmatprep.subr.bf16.mxu0 0
        %664 = vmatpush1.bf16.msra.mxu0 %v655
        %665 = vmatprep.subr.bf16.mxu0 0
        %666 = vmatpush1.bf16.msra.mxu0 %v656
        %667 = vmatprep.subr.bf16.mxu0 0
        %668 = vmatpush1.bf16.msra.mxu0 %v657
        %669 = vmatprep.subr.bf16.mxu0 0
        %670 = vmatpush1.bf16.msra.mxu0 %v658
        %671 = vmatprep.subr.bf16.mxu0 0
        %672 = vmatpush1.bf16.msra.mxu0 0
        %673 = vmatprep.subr.bf16.mxu0 0
        %674 = vmatpush1.bf16.msra.mxu0 0
        %675 = vmatprep.subr.bf16.mxu0 0
        %676 = vmatpush1.bf16.msra.mxu0 0
        %677 = vmatprep.subr.bf16.mxu0 0
        %678 = vmatpush1.bf16.msra.mxu0 0
        %679 = vmatprep.subr.bf16.mxu0 0
        %680 = vmatpush1.bf16.msra.mxu0 0
        %681 = vmatprep.subr.bf16.mxu0 0
        %682 = vmatpush1.bf16.msra.mxu0 0
        %683 = vmatprep.subr.bf16.mxu0 0
        %684 = vmatpush1.bf16.msra.mxu0 0
        %685 = vmatprep.subr.bf16.mxu0 0
        %686 = vmatpush1.bf16.msra.mxu0 0
        %687 = vmatprep.subr.bf16.mxu0 0
        %688 = vmatpush1.bf16.msra.mxu0 0
        %689 = vmatprep.subr.bf16.mxu0 0
        %690 = vmatpush1.bf16.msra.mxu0 0
        %691 = vmatprep.subr.bf16.mxu0 0
        %692 = vmatpush1.bf16.msra.mxu0 0
        %693 = vmatprep.subr.bf16.mxu0 0
        %694 = vmatpush1.bf16.msra.mxu0 0
        %695 = vmatprep.mubr.bf16.mxu0 0
        %696 = vmatmul.mubr.bf16.gmra.mrb[0].mxu0 %v582
        %v697 = vpop.f32.mrb[0].mxu0
        %v698 = vadd.f32 %v637, %v697
        %v699 = vpop.f32.mrb[0].mxu0
        %v700 = vpop.f32.mrb[0].mxu0
        %v701 = vpop.f32.mrb[0].mxu0
        %702 = vdwg.mxu0
        %v703 = vmax.f32 %v619, 0.0
        %v704 = vand.u32 2147483647, %v619
        %v705 = vsub.f32 0.0, %v704
        %v706 = vmul.f32 %v705, 1.442695
        %v707 = vpow.pop %v706
        %v708 = vadd.f32 %v707, 1.0
        %v709 = vlog2.pop %v708
        %v710 = vmul.f32 %v709, 0.6931472
        %v711 = vmul.f32 -0.5, %v707
        %v712 = vadd.f32 %v711, 1.0
        %v713 = vmul.f32 %v712, %v707
        %v714 = vand.u32 2147483647, %v707
        %vm715 = vcmp.lt.f32.partialorder %v714, 0.0004427343
        %v716 = vsel %vm715, %v713, %v710
        %v717 = vadd.f32 %v703, %v716
        %v718 = vmax.f32 %v698, 0.0
        %v719 = vand.u32 2147483647, %v698
        %v720 = vsub.f32 0.0, %v719
        %v721 = vmul.f32 %v720, 1.442695
        %v722 = vpow.pop %v721
        %v723 = vadd.f32 %v722, 1.0
        %v724 = vlog2.pop %v723
        %v725 = vmul.f32 %v724, 0.6931472
        %v726 = vmul.f32 -0.5, %v722
        %v727 = vadd.f32 %v726, 1.0
        %v728 = vmul.f32 %v727, %v722
        %v729 = vand.u32 2147483647, %v722
        %vm730 = vcmp.lt.f32.partialorder %v729, 0.0004427343
        %v731 = vsel %vm730, %v728, %v725
        %v732 = vadd.f32 %v718, %v731
        %v733 = vadd.f32 %v732, %v717
        %v734 = vadd.f32 %v733, 1e-08
        %v735 = vrcp.pop %v734
        %736 = vst [vmem:[%s449] sm:$0xff] %v732
        %v737 = vmul.f32 %v732, %v735
        %738 = vst [vmem:[%s456] sm:$0xff] %v737
        %s739 = sand.u32 %s224, 1
        %s740 = scalar_lea.sflag [#allocation5], %s739
        %s741 = sand.u32 %s224, 1
        %s742 = smul.addr %s741, 8
        %s743 = scalar_lea.vmem [#allocation10], %s742
        %s744 = sand.u32 %s252, 1
        %s745 = scalar_lea.sflag [#allocation12], %s744
        %s746 = sand.u32 %s252, 1
        %s747 = smul.addr %s746, 8
        %s748 = scalar_lea.vmem [#allocation11], %s747
        // Predicated region
        $region69: #{tpu_custom_call.1} parent=47 // pred_check
          %p749 = pneg %p234
        $region70: #{tpu_custom_call.1} parent=47 // pred_check_branch
          %751 = sbr.rel (%p749) target = $region72
        $region71: #{tpu_custom_call.1} parent=47 // pred_region
          %s753 = ssub.s32 128, 128
          %754 = vsyncadd %s740, %s753
          %s755 = smul.addr %s34, 2
          %s756 = sadd.s32 %s35, %s755
          %s757 = smul.addr %s756, 128
          %s758 = scalar_lea.hbm %s7, %s757
          %s760 = sshll.u32 %s743, 4
          %s761 = int_to_ptr.vmem [resolvable:$true] %s760
          %763 = dma.vmem_to_hbm [thread:$0]  %s761, 128, %s758, %s740
        $region72: #{tpu_custom_call.1} parent=47 // pred_fallthru
          _
        // Predicated region
        $region73: #{tpu_custom_call.1} parent=47 // pred_check
          %p764 = pneg %p262
        $region74: #{tpu_custom_call.1} parent=47 // pred_check_branch
          %766 = sbr.rel (%p764) target = $region76
        $region75: #{tpu_custom_call.1} parent=47 // pred_region
          %s768 = ssub.s32 128, 128
          %769 = vsyncadd %s745, %s768
          %s770 = smul.addr %s34, 2
          %s771 = sadd.s32 %s35, %s770
          %s772 = smul.addr %s771, 128
          %s773 = scalar_lea.hbm %s8, %s772
          %s775 = sshll.u32 %s748, 4
          %s776 = int_to_ptr.vmem [resolvable:$true] %s775
          %778 = dma.vmem_to_hbm [thread:$0]  %s776, 128, %s773, %s745
        $region76: #{tpu_custom_call.1} parent=47 // pred_fallthru
          _
      $region48: #{tpu_custom_call.1} parent=5 // pred_fallthru
        _
      %p779 = scmp.le.s32.totalorder 2, %s25
      // Predicated region
      $region77: #{tpu_custom_call.1} parent=5 // pred_check
        %p780 = pneg %p779
      $region78: #{tpu_custom_call.1} parent=5 // pred_check_branch
        %782 = sbr.rel (%p780) target = $region80
      $region79: #{tpu_custom_call.1} parent=5 // pred_region
        %s783 = ssub.s32 %s25, 2
        // Predicated region
        $region81: #{tpu_custom_call.1} parent=79 // pred_check
          %p784 = pneg %p240
        $region82: #{tpu_custom_call.1} parent=79 // pred_check_branch
          %786 = sbr.rel (%p784) target = $region84
        $region83: #{tpu_custom_call.1} parent=79 // pred_region
          %s787 = sand.u32 %s225, 1
          %s788 = scalar_lea.sflag [#allocation5], %s787
          %s789 = sand.u32 %s225, 1
          %s790 = smul.addr %s789, 8
          %s791 = scalar_lea.vmem [#allocation10], %s790
          %792 = dma.done %s788, 128
        $region84: #{tpu_custom_call.1} parent=79 // pred_fallthru
          _
        // Predicated region
        $region85: #{tpu_custom_call.1} parent=79 // pred_check
          %p793 = pneg %p268
        $region86: #{tpu_custom_call.1} parent=79 // pred_check_branch
          %795 = sbr.rel (%p793) target = $region88
        $region87: #{tpu_custom_call.1} parent=79 // pred_region
          %s796 = sand.u32 %s253, 1
          %s797 = scalar_lea.sflag [#allocation12], %s796
          %s798 = sand.u32 %s253, 1
          %s799 = smul.addr %s798, 8
          %s800 = scalar_lea.vmem [#allocation11], %s799
          %801 = dma.done %s797, 128
        $region88: #{tpu_custom_call.1} parent=79 // pred_fallthru
          _
      $region80: #{tpu_custom_call.1} parent=5 // pred_fallthru
        _
    $region6: #{tpu_custom_call.1} parent=1 // loop_footer
      %s29 = sadd.s32 1, %s25
    $region7: #{tpu_custom_call.1} parent=1 // loop_footer_branch
      %24 = sbr.rel target = $region3
    $region8: #{tpu_custom_call.1} parent=1 // loop_exit
      _
    %802 = vsyncpa [#allocation4], 1
    %s803 = scalar_lea.sflag [#allocation4], 1
    %804 = vsyncpa %s803, 1
    %805 = vsyncpa [#allocation7], 1
    %806 = vsyncpa [#allocation5], 1
    %s807 = scalar_lea.sflag [#allocation5], 1
    %808 = vsyncpa %s807, 1
    %809 = vsyncpa [#allocation12], 1
    %s810 = scalar_lea.sflag [#allocation12], 1
    %811 = vsyncpa %s810, 1

</llo_original>
